<compile_context>
chip_gen: v7x
topology: tpu7x:2x2x1
jax: 0.10.0
libtpu: 0.0.40
codegen_flags: <defaults>
</compile_context>

<pallas_src>
import jax
import jax.numpy as jnp
from jax.experimental import pallas as pl
from jax.experimental.pallas import tpu as pltpu

_LANES = 128


def _dt2_kernel(x1_ref, y1_ref, x2_ref, y2_ref, o_ref):
    # Load in the (possibly narrow) storage dtype, compute in f32 on the VPU/EUP,
    # store back in the output dtype.
    x1 = x1_ref[...].astype(jnp.float32)
    y1 = y1_ref[...].astype(jnp.float32)
    x2 = x2_ref[...].astype(jnp.float32)
    y2 = y2_ref[...].astype(jnp.float32)
    dx = x1 - x2
    dy = y1 - y2
    o_ref[...] = jnp.sqrt(dx * dx + dy * dy).astype(o_ref.dtype)


def _round_up(x, m):
    return (x + m - 1) // m * m


def dt2(x1, y1, x2, y2, *, max_block_bytes=2 << 20, vmem_limit_bytes=48 << 20):
    """Computes sqrt((x1-x2)^2 + (y1-y2)^2) elementwise via a Pallas TPU kernel."""
    assert x1.shape == y1.shape == x2.shape == y2.shape
    orig_shape = x1.shape

    in_dtype = jnp.result_type(x1.dtype, y1.dtype, x2.dtype, y2.dtype)
    if not jnp.issubdtype(in_dtype, jnp.floating):
        # PyTorch promotes non-float inputs to float for sqrt.
        in_dtype = jnp.float32
    out_dtype = in_dtype
    itemsize = jnp.dtype(in_dtype).itemsize

    n = x1.size
    if n == 0:
        return jnp.zeros(orig_shape, out_dtype)

    # Minimal padding: only to the next multiple of 128 lanes (<=127 elements).
    rows = pl.cdiv(n, _LANES)
    n_pad = rows * _LANES

    def prep(a):
        flat = jnp.ravel(a)
        if flat.dtype != in_dtype:
            flat = flat.astype(in_dtype)
        if n_pad != n:
            flat = jnp.pad(flat, (0, n_pad - n))
        return flat.reshape(rows, _LANES)

    x1f, y1f, x2f, y2f = (prep(a) for a in (x1, y1, x2, y2))

    # Block sizing: big blocks to amortize per-step overhead; keep (8,128)
    # alignment and (when possible) at least 2 grid steps for v7x megacore.
    desired_rows = max(8, (max_block_bytes // (_LANES * itemsize)) // 8 * 8)
    half_rows = max(8, _round_up((rows + 1) // 2, 8))
    tile_rows = min(desired_rows, half_rows)
    grid = (pl.cdiv(rows, tile_rows),)

    spec = pl.BlockSpec((tile_rows, _LANES), lambda i: (i, 0))

    cost = pl.CostEstimate(
        flops=5 * n,                     # 2 sub + 2 mul + 1 add per element
        transcendentals=n,               # sqrt per element
        bytes_accessed=5 * n * itemsize, # 4 reads + 1 write
    )

    out = pl.pallas_call(
        _dt2_kernel,
        out_shape=jax.ShapeDtypeStruct((rows, _LANES), out_dtype),
        grid_spec=pl.GridSpec(
            grid=grid,
            in_specs=[spec, spec, spec, spec],
            out_specs=spec,
        ),
        compiler_params=pltpu.CompilerParams(
            dimension_semantics=("parallel",),
            vmem_limit_bytes=vmem_limit_bytes,
        ),
        cost_estimate=cost,
    )(x1f, y1f, x2f, y2f)

    if n_pad != n:
        out = out.reshape(-1)[:n]
    return out.reshape(orig_shape)


if __name__ == "__main__":
    key = jax.random.PRNGKey(0)
    k1, k2, k3, k4 = jax.random.split(key, 4)
    shape = (2, 4, 16, 16)  # NCHW, small synthetic shapes
    x1 = jax.random.normal(k1, shape, dtype=jnp.float32)
    y1 = jax.random.normal(k2, shape, dtype=jnp.float32)
    x2 = jax.random.normal(k3, shape, dtype=jnp.float32)
    y2 = jax.random.normal(k4, shape, dtype=jnp.float32)

    out = dt2(x1, y1, x2, y2)
    jax.block_until_ready(out)

    ref = jnp.sqrt((x1 - x2) * (x1 - x2) + (y1 - y2) * (y1 - y2))
    assert out.shape == shape and out.dtype == jnp.float32
    assert jnp.allclose(out, ref, atol=1e-6, rtol=1e-6)

    # Ragged element count (not a multiple of 128): exercises the minimal-pad /
    # pl.cdiv ragged-last-block path.
    rshape = (3, 5, 7, 11)
    r1, r2, r3, r4 = (
        jax.random.normal(k, rshape, dtype=jnp.float32)
        for k in jax.random.split(jax.random.PRNGKey(1), 4)
    )
    rout = dt2(r1, r2, r3, r4)
    jax.block_until_ready(rout)
    rref = jnp.sqrt((r1 - r3) * (r1 - r3) + (r2 - r4) * (r2 - r4))
    assert rout.shape == rshape
    assert jnp.allclose(rout, rref, atol=1e-6, rtol=1e-6)

    # bf16 inputs stay bf16 through HBM (compute happens in f32 in-kernel).
    b1, b2, b3, b4 = (a.astype(jnp.bfloat16) for a in (x1, y1, x2, y2))
    bout = dt2(b1, b2, b3, b4)
    jax.block_until_ready(bout)
    assert bout.shape == shape and bout.dtype == jnp.bfloat16
    assert jnp.allclose(bout.astype(jnp.float32), ref, atol=5e-2, rtol=5e-2)

    # TODO(synk): integer inputs are promoted to float32 here; PyTorch's exact
    # integer->float promotion table is not replicated.
    print("KERNEL_OK")
</pallas_src>

<mosaic_0001>
module attributes {stable_mosaic.version = 11 : i64} {
  func.func @_dt2_kernel(%arg0: i32, %arg1: memref<8x128xf32, #tpu.memory_space<vmem>>, %arg2: memref<8x128xf32, #tpu.memory_space<vmem>>, %arg3: memref<8x128xf32, #tpu.memory_space<vmem>>, %arg4: memref<8x128xf32, #tpu.memory_space<vmem>>, %arg5: memref<8x128xf32, #tpu.memory_space<vmem>>) attributes {dimension_semantics = [#tpu.dimension_semantics<parallel>], iteration_bounds = array<i64: 2>, scalar_prefetch = 0 : i64, scratch_operands = 0 : i64, tpu.core_type = #tpu.core_type<tc>, window_params = [{transform_indices = @transform_0, window_bounds = array<i64: 8, 128>}, {transform_indices = @transform_1, window_bounds = array<i64: 8, 128>}, {transform_indices = @transform_2, window_bounds = array<i64: 8, 128>}, {transform_indices = @transform_3, window_bounds = array<i64: 8, 128>}, {transform_indices = @transform_4, window_bounds = array<i64: 8, 128>}]} {
    %c0 = arith.constant 0 : index
    %c0_0 = arith.constant 0 : index
    %0 = vector.load %arg1[%c0, %c0_0] : memref<8x128xf32, #tpu.memory_space<vmem>>, vector<8x128xf32>
    %c0_1 = arith.constant 0 : index
    %c0_2 = arith.constant 0 : index
    %1 = vector.load %arg2[%c0_1, %c0_2] : memref<8x128xf32, #tpu.memory_space<vmem>>, vector<8x128xf32>
    %c0_3 = arith.constant 0 : index
    %c0_4 = arith.constant 0 : index
    %2 = vector.load %arg3[%c0_3, %c0_4] : memref<8x128xf32, #tpu.memory_space<vmem>>, vector<8x128xf32>
    %c0_5 = arith.constant 0 : index
    %c0_6 = arith.constant 0 : index
    %3 = vector.load %arg4[%c0_5, %c0_6] : memref<8x128xf32, #tpu.memory_space<vmem>>, vector<8x128xf32>
    %4 = arith.subf %0, %2 : vector<8x128xf32>
    %5 = arith.subf %1, %3 : vector<8x128xf32>
    %6 = arith.mulf %4, %4 : vector<8x128xf32>
    %7 = arith.mulf %5, %5 : vector<8x128xf32>
    %8 = arith.addf %6, %7 : vector<8x128xf32>
    %9 = math.sqrt %8 : vector<8x128xf32>
    %c0_7 = arith.constant 0 : index
    %c0_8 = arith.constant 0 : index
    %10 = vector.load %arg5[%c0_7, %c0_8] : memref<8x128xf32, #tpu.memory_space<vmem>>, vector<8x128xf32>
    tpu.vector_store %arg5[%c0_7, %c0_8], %9 {strides = array<i32>} : memref<8x128xf32, #tpu.memory_space<vmem>>, vector<8x128xf32>,
    return
  }
  func.func @transform_0(%arg0: i32) -> (i32, i32) {
    %c0_i32 = arith.constant 0 : i32
    %c0_i32_0 = arith.constant 0 : i32
    return %arg0, %c0_i32 : i32, i32
  }
  func.func @transform_1(%arg0: i32) -> (i32, i32) {
    %c0_i32 = arith.constant 0 : i32
    %c0_i32_0 = arith.constant 0 : i32
    return %arg0, %c0_i32 : i32, i32
  }
  func.func @transform_2(%arg0: i32) -> (i32, i32) {
    %c0_i32 = arith.constant 0 : i32
    %c0_i32_0 = arith.constant 0 : i32
    return %arg0, %c0_i32 : i32, i32
  }
  func.func @transform_3(%arg0: i32) -> (i32, i32) {
    %c0_i32 = arith.constant 0 : i32
    %c0_i32_0 = arith.constant 0 : i32
    return %arg0, %c0_i32 : i32, i32
  }
  func.func @transform_4(%arg0: i32) -> (i32, i32) {
    %c0_i32 = arith.constant 0 : i32
    %c0_i32_0 = arith.constant 0 : i32
    return %arg0, %c0_i32 : i32, i32
  }
}

</mosaic_0001>

<llo_original>
// kernel: tpu_custom_call.1
$region0: #{tpu_custom_call.1}
  #allocation0 [shape = 'u32[]', space=smem, size = 0x4, offset = 0x4, fixed_abs, tag = 'smem constant byte address 0x4 - core index']
  #allocation1 [shape = 'u32[144,128]{1,0:T(1,128)}', space=vmem, size = 0x12000, scoped, tag = 'internal scratch']
  %s0 = inlined_call_operand.hbm [shape: f32[16,128], index: 0, kind: input, shape index: {}]
  %s1 = inlined_call_operand.hbm [shape: f32[16,128], index: 1, kind: input, shape index: {}]
  %s2 = inlined_call_operand.hbm [shape: f32[16,128], index: 2, kind: input, shape index: {}]
  %s3 = inlined_call_operand.hbm [shape: f32[16,128], index: 3, kind: input, shape index: {}]
  %s4 = inlined_call_operand.hbm [shape: f32[16,128], index: 4, kind: output, shape index: {}]
  %s5 = sld [smem:[#allocation0]]
  $region65: #{tpu_custom_call.1} parent=0
    _
  %s7 = ssub.s32 1, %s5
  %s8 = scalar_select 0, %s7, %s5
  $region1: #{tpu_custom_call.1} parent=0
    #allocation2 [shape = 'u8[8192]{0}', space=vmem, size = 0x2000, scoped, tag = 'input window, operand 0']
    #allocation3 [shape = 's32[2]{0}', space=sflag, size = 0x8, scoped, tag = 'scoped memory for tpu_custom_call.1']
    #allocation4 [shape = 's32[2]{0}', space=sflag, size = 0x8, scoped, tag = 'scoped memory for tpu_custom_call.1']
    #allocation5 [shape = 'u8[8192]{0}', space=vmem, size = 0x2000, scoped, tag = 'input window, operand 1']
    #allocation6 [shape = 's32[2]{0}', space=sflag, size = 0x8, scoped, tag = 'scoped memory for tpu_custom_call.1']
    #allocation7 [shape = 'u8[8192]{0}', space=vmem, size = 0x2000, scoped, tag = 'input window, operand 2']
    #allocation8 [shape = 'u8[8192]{0}', space=vmem, size = 0x2000, scoped, tag = 'input window, operand 3']
    #allocation9 [shape = 's32[2]{0}', space=sflag, size = 0x8, scoped, tag = 'scoped memory for tpu_custom_call.1']
    #allocation10 [shape = 'u8[8192]{0}', space=vmem, size = 0x2000, scoped, tag = 'output window, operand 0']
    %9 = vsyncpa [#allocation3], 0
    %s10 = scalar_lea.sflag [#allocation3], 1
    %11 = vsyncpa %s10, 0
    %12 = vsyncpa [#allocation6], 0
    %s13 = scalar_lea.sflag [#allocation6], 1
    %14 = vsyncpa %s13, 0
    %15 = vsyncpa [#allocation9], 0
    %s16 = scalar_lea.sflag [#allocation9], 1
    %17 = vsyncpa %s16, 0
    %18 = vsyncpa [#allocation4], 0
    %s19 = scalar_lea.sflag [#allocation4], 1
    %20 = vsyncpa %s19, 0
    loop: start=0, step=1, limit=4
    $region2: #{tpu_custom_call.1} parent=1 // loop_pre_header
      _
    $region3: #{tpu_custom_call.1} parent=1 // loop_header
      %s22 = sphi 0, %s26
      %p23 = scmp.ge.s32.totalorder %s22, 4
      %s32 = sphi 0, %s34
      %s35 = sphi 0, %s32
      %s36 = sphi 0, %s35
      %s52 = sphi 0, %s36
      %s58 = sphi 0, %s60
      %s61 = sphi 0, %s58
      %s62 = sphi 0, %s61
      %s78 = sphi 0, %s62
      %s84 = sphi 0, %s86
      %s87 = sphi 0, %s84
      %s88 = sphi 0, %s87
      %s104 = sphi 0, %s88
      %s110 = sphi 0, %s112
      %s113 = sphi 0, %s110
      %s114 = sphi 0, %s113
      %s130 = sphi 0, %s114
      %s136 = sphi 0, %s138
      %s139 = sphi 0, %s136
      %s140 = sphi 0, %s139
      %s156 = sphi 0, %s140
    $region4: #{tpu_custom_call.1} parent=1 // loop_header_branch
      %25 = sbr.rel (%p23) target = $region8
    $region5: #{tpu_custom_call.1} parent=1 // loop_body
      %s27 = ssub.s32 %s22, 1
      %s28 = ssub.s32 %s22, 2
      %s29 = sadd.s32 %s22, 1
      %s30 = ssub.s32 %s22, %s29
      %p31 = scmp.eq.s32.totalorder %s30, 0
      %s33 = sadd.s32 %s32, 1
      %s34 = scalar_select %p31, %s32, %s33
      %p37 = pneg %p31
      %p38 = scmp.eq.s32.totalorder %s22, 1
      %p39 = por %p37, %p38
      %p40 = scmp.ne.s32.totalorder %s32, %s35
      %p41 = scmp.eq.s32.totalorder %s22, 0
      %p42 = por %p40, %p41
      %p43 = scmp.ne.s32.totalorder %s32, %s35
      %p44 = scmp.eq.s32.totalorder %s27, 1
      %p45 = por %p43, %p44
      %p46 = scmp.ne.s32.totalorder %s35, %s36
      %p47 = scmp.eq.s32.totalorder %s27, 0
      %p48 = por %p46, %p47
      %p49 = scmp.ne.s32.totalorder %s35, %s36
      %p50 = scmp.eq.s32.totalorder %s28, 1
      %p51 = por %p49, %p50
      %p53 = scmp.ne.s32.totalorder %s36, %s52
      %p54 = scmp.eq.s32.totalorder %s28, 0
      %p55 = por %p53, %p54
      %s56 = ssub.s32 %s22, %s29
      %p57 = scmp.eq.s32.totalorder %s56, 0
      %s59 = sadd.s32 %s58, 1
      %s60 = scalar_select %p57, %s58, %s59
      %p63 = pneg %p57
      %p64 = scmp.eq.s32.totalorder %s22, 1
      %p65 = por %p63, %p64
      %p66 = scmp.ne.s32.totalorder %s58, %s61
      %p67 = scmp.eq.s32.totalorder %s22, 0
      %p68 = por %p66, %p67
      %p69 = scmp.ne.s32.totalorder %s58, %s61
      %p70 = scmp.eq.s32.totalorder %s27, 1
      %p71 = por %p69, %p70
      %p72 = scmp.ne.s32.totalorder %s61, %s62
      %p73 = scmp.eq.s32.totalorder %s27, 0
      %p74 = por %p72, %p73
      %p75 = scmp.ne.s32.totalorder %s61, %s62
      %p76 = scmp.eq.s32.totalorder %s28, 1
      %p77 = por %p75, %p76
      %p79 = scmp.ne.s32.totalorder %s62, %s78
      %p80 = scmp.eq.s32.totalorder %s28, 0
      %p81 = por %p79, %p80
      %s82 = ssub.s32 %s22, %s29
      %p83 = scmp.eq.s32.totalorder %s82, 0
      %s85 = sadd.s32 %s84, 1
      %s86 = scalar_select %p83, %s84, %s85
      %p89 = pneg %p83
      %p90 = scmp.eq.s32.totalorder %s22, 1
      %p91 = por %p89, %p90
      %p92 = scmp.ne.s32.totalorder %s84, %s87
      %p93 = scmp.eq.s32.totalorder %s22, 0
      %p94 = por %p92, %p93
      %p95 = scmp.ne.s32.totalorder %s84, %s87
      %p96 = scmp.eq.s32.totalorder %s27, 1
      %p97 = por %p95, %p96
      %p98 = scmp.ne.s32.totalorder %s87, %s88
      %p99 = scmp.eq.s32.totalorder %s27, 0
      %p100 = por %p98, %p99
      %p101 = scmp.ne.s32.totalorder %s87, %s88
      %p102 = scmp.eq.s32.totalorder %s28, 1
      %p103 = por %p101, %p102
      %p105 = scmp.ne.s32.totalorder %s88, %s104
      %p106 = scmp.eq.s32.totalorder %s28, 0
      %p107 = por %p105, %p106
      %s108 = ssub.s32 %s22, %s29
      %p109 = scmp.eq.s32.totalorder %s108, 0
      %s111 = sadd.s32 %s110, 1
      %s112 = scalar_select %p109, %s110, %s111
      %p115 = pneg %p109
      %p116 = scmp.eq.s32.totalorder %s22, 1
      %p117 = por %p115, %p116
      %p118 = scmp.ne.s32.totalorder %s110, %s113
      %p119 = scmp.eq.s32.totalorder %s22, 0
      %p120 = por %p118, %p119
      %p121 = scmp.ne.s32.totalorder %s110, %s113
      %p122 = scmp.eq.s32.totalorder %s27, 1
      %p123 = por %p121, %p122
      %p124 = scmp.ne.s32.totalorder %s113, %s114
      %p125 = scmp.eq.s32.totalorder %s27, 0
      %p126 = por %p124, %p125
      %p127 = scmp.ne.s32.totalorder %s113, %s114
      %p128 = scmp.eq.s32.totalorder %s28, 1
      %p129 = por %p127, %p128
      %p131 = scmp.ne.s32.totalorder %s114, %s130
      %p132 = scmp.eq.s32.totalorder %s28, 0
      %p133 = por %p131, %p132
      %s134 = ssub.s32 %s22, %s29
      %p135 = scmp.eq.s32.totalorder %s134, 0
      %s137 = sadd.s32 %s136, 1
      %s138 = scalar_select %p135, %s136, %s137
      %p141 = pneg %p135
      %p142 = scmp.eq.s32.totalorder %s22, 1
      %p143 = por %p141, %p142
      %p144 = scmp.ne.s32.totalorder %s136, %s139
      %p145 = scmp.eq.s32.totalorder %s22, 0
      %p146 = por %p144, %p145
      %p147 = scmp.ne.s32.totalorder %s136, %s139
      %p148 = scmp.eq.s32.totalorder %s27, 1
      %p149 = por %p147, %p148
      %p150 = scmp.ne.s32.totalorder %s139, %s140
      %p151 = scmp.eq.s32.totalorder %s27, 0
      %p152 = por %p150, %p151
      %p153 = scmp.ne.s32.totalorder %s139, %s140
      %p154 = scmp.eq.s32.totalorder %s28, 1
      %p155 = por %p153, %p154
      %p157 = scmp.ne.s32.totalorder %s140, %s156
      %p158 = scmp.eq.s32.totalorder %s28, 0
      %p159 = por %p157, %p158
      %p160 = scmp.le.s32.totalorder 1, %s22
      %p161 = scmp.lt.s32.totalorder %s22, 3
      %p162 = pnand %p160, %p161
      %p163 = pneg %p162
      // Predicated region
      $region9: #{tpu_custom_call.1} parent=5 // pred_check
        _
      $region10: #{tpu_custom_call.1} parent=5 // pred_check_branch
        %165 = sbr.rel (%p162) target = $region12
      $region11: #{tpu_custom_call.1} parent=5 // pred_region
        %s166 = ssub.s32 %s22, 1
      $region12: #{tpu_custom_call.1} parent=5 // pred_fallthru
        _
      %p167 = scmp.lt.s32.totalorder %s22, 2
      // Predicated region
      $region13: #{tpu_custom_call.1} parent=5 // pred_check
        %p168 = pneg %p167
      $region14: #{tpu_custom_call.1} parent=5 // pred_check_branch
        %170 = sbr.rel (%p168) target = $region16
      $region15: #{tpu_custom_call.1} parent=5 // pred_region
        // Predicated region
        $region17: #{tpu_custom_call.1} parent=15 // pred_check
          %p171 = pneg %p42
        $region18: #{tpu_custom_call.1} parent=15 // pred_check_branch
          %173 = sbr.rel (%p171) target = $region20
        $region19: #{tpu_custom_call.1} parent=15 // pred_region
          %s174 = sand.u32 %s32, 1
          %s175 = scalar_lea.sflag [#allocation3], %s174
          %s176 = sand.u32 %s32, 1
          %s177 = smul.addr %s176, 8
          %s178 = scalar_lea.vmem [#allocation2], %s177
          %s180 = ssub.s32 128, 128
          %181 = vsyncadd %s175, %s180
          %s182 = smul.addr %s22, 128
          %s183 = scalar_lea.hbm %s0, %s182
          %s185 = sshll.u32 %s178, 4
          %s186 = int_to_ptr.vmem [resolvable:$true] %s185
          %188 = dma.hbm_to_vmem [thread:$0]  %s183, 128, %s186, %s175
        $region20: #{tpu_custom_call.1} parent=15 // pred_fallthru
          _
        // Predicated region
        $region21: #{tpu_custom_call.1} parent=15 // pred_check
          %p189 = pneg %p68
        $region22: #{tpu_custom_call.1} parent=15 // pred_check_branch
          %191 = sbr.rel (%p189) target = $region24
        $region23: #{tpu_custom_call.1} parent=15 // pred_region
          %s192 = sand.u32 %s22, 1
          %s193 = scalar_lea.sflag [#allocation6], %s192
          %s194 = sand.u32 %s58, 1
          %s195 = smul.addr %s194, 8
          %s196 = scalar_lea.vmem [#allocation5], %s195
          %s198 = ssub.s32 128, 128
          %199 = vsyncadd %s193, %s198
          %s200 = smul.addr %s22, 128
          %s201 = scalar_lea.hbm %s1, %s200
          %s203 = sshll.u32 %s196, 4
          %s204 = int_to_ptr.vmem [resolvable:$true] %s203
          %206 = dma.hbm_to_vmem [thread:$0]  %s201, 128, %s204, %s193
        $region24: #{tpu_custom_call.1} parent=15 // pred_fallthru
          _
        // Predicated region
        $region25: #{tpu_custom_call.1} parent=15 // pred_check
          %p207 = pneg %p94
        $region26: #{tpu_custom_call.1} parent=15 // pred_check_branch
          %209 = sbr.rel (%p207) target = $region28
        $region27: #{tpu_custom_call.1} parent=15 // pred_region
          %s210 = sand.u32 %s22, 1
          %s211 = scalar_lea.sflag [#allocation6], %s210
          %s212 = sand.u32 %s84, 1
          %s213 = smul.addr %s212, 8
          %s214 = scalar_lea.vmem [#allocation7], %s213
          %s216 = ssub.s32 128, 128
          %217 = vsyncadd %s211, %s216
          %s218 = smul.addr %s22, 128
          %s219 = scalar_lea.hbm %s2, %s218
          %s221 = sshll.u32 %s214, 4
          %s222 = int_to_ptr.vmem [resolvable:$true] %s221
          %224 = dma.hbm_to_vmem [thread:$0]  %s219, 128, %s222, %s211
        $region28: #{tpu_custom_call.1} parent=15 // pred_fallthru
          _
        // Predicated region
        $region29: #{tpu_custom_call.1} parent=15 // pred_check
          %p225 = pneg %p120
        $region30: #{tpu_custom_call.1} parent=15 // pred_check_branch
          %227 = sbr.rel (%p225) target = $region32
        $region31: #{tpu_custom_call.1} parent=15 // pred_region
          %s228 = sand.u32 %s110, 1
          %s229 = scalar_lea.sflag [#allocation9], %s228
          %s230 = sand.u32 %s110, 1
          %s231 = smul.addr %s230, 8
          %s232 = scalar_lea.vmem [#allocation8], %s231
          %s234 = ssub.s32 128, 128
          %235 = vsyncadd %s229, %s234
          %s236 = smul.addr %s22, 128
          %s237 = scalar_lea.hbm %s3, %s236
          %s239 = sshll.u32 %s232, 4
          %s240 = int_to_ptr.vmem [resolvable:$true] %s239
          %242 = dma.hbm_to_vmem [thread:$0]  %s237, 128, %s240, %s229
        $region32: #{tpu_custom_call.1} parent=15 // pred_fallthru
          _
      $region16: #{tpu_custom_call.1} parent=5 // pred_fallthru
        _
      %p243 = scmp.le.s32.totalorder 1, %s22
      %p244 = scmp.lt.s32.totalorder %s22, 3
      %p245 = pnand %p243, %p244
      %p246 = pneg %p245
      // Predicated region
      $region33: #{tpu_custom_call.1} parent=5 // pred_check
        _
      $region34: #{tpu_custom_call.1} parent=5 // pred_check_branch
        %248 = sbr.rel (%p245) target = $region36
      $region35: #{tpu_custom_call.1} parent=5 // pred_region
        %s249 = ssub.s32 %s22, 1
        %s250 = sand.u32 %s35, 1
        %s251 = scalar_lea.sflag [#allocation3], %s250
        %s252 = sand.u32 %s35, 1
        %s253 = smul.addr %s252, 8
        %s254 = scalar_lea.vmem [#allocation2], %s253
        // Predicated region
        $region37: #{tpu_custom_call.1} parent=35 // pred_check
          %p255 = pneg %p48
        $region38: #{tpu_custom_call.1} parent=35 // pred_check_branch
          %257 = sbr.rel (%p255) target = $region40
        $region39: #{tpu_custom_call.1} parent=35 // pred_region
          %258 = dma.done %s251, 128
        $region40: #{tpu_custom_call.1} parent=35 // pred_fallthru
          _
        %s259 = sand.u32 %s27, 1
        %s260 = scalar_lea.sflag [#allocation6], %s259
        %s261 = sand.u32 %s61, 1
        %s262 = smul.addr %s261, 8
        %s263 = scalar_lea.vmem [#allocation5], %s262
        // Predicated region
        $region41: #{tpu_custom_call.1} parent=35 // pred_check
          %p264 = pneg %p74
        $region42: #{tpu_custom_call.1} parent=35 // pred_check_branch
          %266 = sbr.rel (%p264) target = $region44
        $region43: #{tpu_custom_call.1} parent=35 // pred_region
          %267 = dma.done %s260, 128
        $region44: #{tpu_custom_call.1} parent=35 // pred_fallthru
          _
        %s268 = sand.u32 %s27, 1
        %s269 = scalar_lea.sflag [#allocation6], %s268
        %s270 = sand.u32 %s87, 1
        %s271 = smul.addr %s270, 8
        %s272 = scalar_lea.vmem [#allocation7], %s271
        // Predicated region
        $region45: #{tpu_custom_call.1} parent=35 // pred_check
          %p273 = pneg %p100
        $region46: #{tpu_custom_call.1} parent=35 // pred_check_branch
          %275 = sbr.rel (%p273) target = $region48
        $region47: #{tpu_custom_call.1} parent=35 // pred_region
          %276 = dma.done %s269, 128
        $region48: #{tpu_custom_call.1} parent=35 // pred_fallthru
          _
        %s277 = sand.u32 %s113, 1
        %s278 = scalar_lea.sflag [#allocation9], %s277
        %s279 = sand.u32 %s113, 1
        %s280 = smul.addr %s279, 8
        %s281 = scalar_lea.vmem [#allocation8], %s280
        // Predicated region
        $region49: #{tpu_custom_call.1} parent=35 // pred_check
          %p282 = pneg %p126
        $region50: #{tpu_custom_call.1} parent=35 // pred_check_branch
          %284 = sbr.rel (%p282) target = $region52
        $region51: #{tpu_custom_call.1} parent=35 // pred_region
          %285 = dma.done %s278, 128
        $region52: #{tpu_custom_call.1} parent=35 // pred_fallthru
          _
        %s286 = sand.u32 %s35, 1
        %s287 = scalar_lea.sflag [#allocation3], %s286
        %s288 = sand.u32 %s35, 1
        %s289 = smul.addr %s288, 8
        %s290 = scalar_lea.vmem [#allocation2], %s289
        %p291 = pneg %p48
        %p292 = pneg %p45
        %s293 = sand.u32 %s27, 1
        %s294 = scalar_lea.sflag [#allocation6], %s293
        %s295 = sand.u32 %s61, 1
        %s296 = smul.addr %s295, 8
        %s297 = scalar_lea.vmem [#allocation5], %s296
        %p298 = pneg %p74
        %p299 = pneg %p71
        %s300 = sand.u32 %s27, 1
        %s301 = scalar_lea.sflag [#allocation6], %s300
        %s302 = sand.u32 %s87, 1
        %s303 = smul.addr %s302, 8
        %s304 = scalar_lea.vmem [#allocation7], %s303
        %p305 = pneg %p100
        %p306 = pneg %p97
        %s307 = sand.u32 %s113, 1
        %s308 = scalar_lea.sflag [#allocation9], %s307
        %s309 = sand.u32 %s113, 1
        %s310 = smul.addr %s309, 8
        %s311 = scalar_lea.vmem [#allocation8], %s310
        %p312 = pneg %p126
        %p313 = pneg %p123
        %p314 = pneg %p152
        %p315 = pneg %p149
        %s316 = sand.u32 %s139, 1
        %s317 = scalar_lea.sflag [#allocation4], %s316
        %s318 = sand.u32 %s139, 1
        %s319 = smul.addr %s318, 8
        %s320 = scalar_lea.vmem [#allocation10], %s319
        %v321 = vld [vmem:[%s254] sm:$0xff]
        %v322 = vld [vmem:[%s263] sm:$0xff]
        %v323 = vld [vmem:[%s272] sm:$0xff]
        %v324 = vld [vmem:[%s281] sm:$0xff]
        %v325 = vsub.f32 %v321, %v323
        %v326 = vsub.f32 %v322, %v324
        %v327 = vmul.f32 %v325, %v325
        %v328 = vmul.f32 %v326, %v326
        %v329 = vadd.f32 %v327, %v328
        %v330 = vrsqrt.pop %v329
        %v331 = vmul.f32 %v329, %v330
        %vm332 = vcmp.eq.f32.partialorder %v329, inf
        %v333 = vsel %vm332, %v329, %v331
        %vm334 = vcmp.eq.f32.partialorder %v329, 0.0
        %v335 = vand.u32 %v329, 2147483648
        %v336 = vsel %vm334, %v335, %v333
        %337 = vst [vmem:[%s320] sm:$0xff] %v336
        %s338 = sand.u32 %s139, 1
        %s339 = scalar_lea.sflag [#allocation4], %s338
        %s340 = sand.u32 %s139, 1
        %s341 = smul.addr %s340, 8
        %s342 = scalar_lea.vmem [#allocation10], %s341
        // Predicated region
        $region53: #{tpu_custom_call.1} parent=35 // pred_check
          %p343 = pneg %p149
        $region54: #{tpu_custom_call.1} parent=35 // pred_check_branch
          %345 = sbr.rel (%p343) target = $region56
        $region55: #{tpu_custom_call.1} parent=35 // pred_region
          %s347 = ssub.s32 128, 128
          %348 = vsyncadd %s339, %s347
          %s349 = smul.addr %s27, 128
          %s350 = scalar_lea.hbm %s4, %s349
          %s352 = sshll.u32 %s342, 4
          %s353 = int_to_ptr.vmem [resolvable:$true] %s352
          %355 = dma.vmem_to_hbm [thread:$0]  %s353, 128, %s350, %s339
        $region56: #{tpu_custom_call.1} parent=35 // pred_fallthru
          _
      $region36: #{tpu_custom_call.1} parent=5 // pred_fallthru
        _
      %p356 = scmp.le.s32.totalorder 2, %s22
      // Predicated region
      $region57: #{tpu_custom_call.1} parent=5 // pred_check
        %p357 = pneg %p356
      $region58: #{tpu_custom_call.1} parent=5 // pred_check_branch
        %359 = sbr.rel (%p357) target = $region60
      $region59: #{tpu_custom_call.1} parent=5 // pred_region
        %s360 = ssub.s32 %s22, 2
        // Predicated region
        $region61: #{tpu_custom_call.1} parent=59 // pred_check
          %p361 = pneg %p155
        $region62: #{tpu_custom_call.1} parent=59 // pred_check_branch
          %363 = sbr.rel (%p361) target = $region64
        $region63: #{tpu_custom_call.1} parent=59 // pred_region
          %s364 = sand.u32 %s140, 1
          %s365 = scalar_lea.sflag [#allocation4], %s364
          %s366 = sand.u32 %s140, 1
          %s367 = smul.addr %s366, 8
          %s368 = scalar_lea.vmem [#allocation10], %s367
          %369 = dma.done %s365, 128
        $region64: #{tpu_custom_call.1} parent=59 // pred_fallthru
          _
      $region60: #{tpu_custom_call.1} parent=5 // pred_fallthru
        _
    $region6: #{tpu_custom_call.1} parent=1 // loop_footer
      %s26 = sadd.s32 1, %s22
    $region7: #{tpu_custom_call.1} parent=1 // loop_footer_branch
      %21 = sbr.rel target = $region3
    $region8: #{tpu_custom_call.1} parent=1 // loop_exit
      _
    %370 = vsyncpa [#allocation3], 1
    %s371 = scalar_lea.sflag [#allocation3], 1
    %372 = vsyncpa %s371, 1
    %373 = vsyncpa [#allocation6], 1
    %s374 = scalar_lea.sflag [#allocation6], 1
    %375 = vsyncpa %s374, 1
    %376 = vsyncpa [#allocation9], 1
    %s377 = scalar_lea.sflag [#allocation9], 1
    %378 = vsyncpa %s377, 1
    %379 = vsyncpa [#allocation4], 1
    %s380 = scalar_lea.sflag [#allocation4], 1
    %381 = vsyncpa %s380, 1

</llo_original>
